<compile_context>
chip_gen: v7x
topology: tpu7x:2x2x1
jax: 0.10.0
libtpu: 0.0.40
codegen_flags: <defaults>
</compile_context>

<pallas_src>
import jax
import jax.numpy as jnp
from jax.experimental import pallas as pl
from jax.experimental.pallas import tpu as pltpu

OBS_NORMALIZATIONS = {
    'agent': 1, 'agent:group': 10, 'agent:hp': 1, 'agent:frozen': 1,
    'agent:energy': 255, 'agent:orientation': 1, 'agent:shield': 1,
    'agent:color': 255, 'agent:inv:ore': 100, 'agent:inv:battery': 100,
    'agent:inv:heart': 100, 'agent:inv:laser': 100, 'agent:inv:armor': 100,
    'agent:inv:blueprint': 100, 'wall': 1, 'wall:hp': 10, 'generator': 1,
    'generator:hp': 30, 'generator:ready': 1, 'mine': 1, 'mine:hp': 30,
    'mine:ready': 1, 'altar': 1, 'altar:hp': 30, 'altar:ready': 1,
    'armory': 1, 'armory:hp': 30, 'armory:ready': 1, 'lasery': 1,
    'lasery:hp': 30, 'lasery:ready': 1, 'lab': 1, 'lab:hp': 30,
    'lab:ready': 1, 'factory': 1, 'factory:hp': 30, 'factory:ready': 1,
    'temple': 1, 'temple:hp': 30, 'temple:ready': 1, 'last_action': 10,
    'last_action_argument': 10, 'agent:kinship': 10,
}


def _normalize_kernel(obs_ref, inv_ref, out_ref):
    # obs_ref: (tr, L) lane-dense tile in its RAW dtype (cast fused here);
    # inv_ref: (tr, 1) per-row f32 reciprocal, broadcast across lanes;
    # out_ref: (tr, L) in the requested output dtype (downcast fused here).
    x = obs_ref[...].astype(jnp.float32)
    out_ref[...] = (x * inv_ref[...]).astype(out_ref.dtype)


def _sublane_multiple(dtype) -> int:
    # Second-to-last block dim must be a multiple of 8 * (32-bit / bit-width)
    # (8 for f32/i32, 16 for bf16, 32 for int8/uint8), unless it equals the
    # full array extent.
    return max(8, 32 // jnp.dtype(dtype).itemsize)


def _block_target_bytes() -> int:
    """Target (input + output) bytes per grid step.

    Double-buffered footprint ~= 2x this value, so keep it under each
    generation's default scoped-VMEM limit while being large enough to
    amortize the ~0.35 us/step pipeline overhead against HBM bandwidth.
    """
    try:
        kind = jax.devices()[0].device_kind.lower()
    except Exception:
        kind = ""
    if "v7" in kind:
        return 12 << 20   # ~3.2 TB/s HBM; 2x = 24 MiB < 32 MiB scoped default
    if "v6" in kind:
        return 8 << 20    # 2x = 16 MiB < 32 MiB scoped default
    return 6 << 20        # v5e & older: 2x = 12 MiB < 16 MiB scoped default


def _pick_row_block(rows: int, row_bytes: int, mult: int) -> int:
    """Row-block size: sublane-aligned, ~target bytes, >=2 grid steps when possible."""
    if rows <= mult:
        return rows  # full extent is always a legal block shape
    target = _block_target_bytes()
    tr = max(mult, (target // max(row_bytes, 1)) // mult * mult)
    # Cap at ceil(rows/2) rounded up to the multiple so the "parallel" axis has
    # >=2 steps and can split across v7x's two TensorCores (no-op on v5e/v6e).
    half = pl.cdiv(pl.cdiv(rows, 2), mult) * mult
    return min(tr, half, rows)


def make_observation_normalizer(grid_features, out_dtype=jnp.float32):
    """Returns (norm_buffer, apply_fn). norm_buffer has shape (1, C, 1, 1).

    out_dtype defaults to float32, matching PyTorch's `obs / float32_norm`
    type promotion for integer, bf16 and f32 observations. Pass bf16 to halve
    store traffic when the downstream layer consumes bf16.
    """
    num_objects = len(grid_features)
    obs_norm = jnp.array(
        [OBS_NORMALIZATIONS[k] for k in grid_features], dtype=jnp.float32
    ).reshape(1, num_objects, 1, 1)
    inv_norm = (1.0 / obs_norm).reshape(num_objects)  # (C,) precomputed reciprocals

    def apply(obs):
        B, C, H, W = obs.shape
        assert C == num_objects, "channel dim must match number of grid features"
        rows, lanes = B * C, H * W

        # Lane-dense 2-D slab (free, contiguous reshape). Raw dtype is kept so
        # the int->f32 upcast happens inside the kernel, not as a pre-kernel
        # HBM-materializing convert.
        # NOTE: if H*W is far off a multiple of 128, stores are partially
        # masked (vst.msk); for typical observation sizes the lane waste is a
        # few percent and accepted.
        x = obs.reshape(rows, lanes)
        # Per-row f32 reciprocal column: row r corresponds to channel r % C.
        inv_col = jnp.broadcast_to(inv_norm[None, :], (B, C)).reshape(rows, 1)

        in_isz = jnp.dtype(obs.dtype).itemsize
        out_isz = jnp.dtype(out_dtype).itemsize
        mult = _sublane_multiple(obs.dtype)
        tr = _pick_row_block(rows, lanes * (in_isz + out_isz), mult)
        grid = (pl.cdiv(rows, tr),)  # ragged last block handled by Pallas

        out = pl.pallas_call(
            _normalize_kernel,
            out_shape=jax.ShapeDtypeStruct((rows, lanes), out_dtype),
            grid_spec=pltpu.PrefetchScalarGridSpec(
                num_scalar_prefetch=0,
                grid=grid,
                in_specs=[
                    # Big lane-dense data block: (tr, H*W) per grid step.
                    pl.BlockSpec((tr, lanes), lambda i: (i, 0)),
                    # Matching per-row reciprocal column.
                    pl.BlockSpec((tr, 1), lambda i: (i, 0)),
                ],
                out_specs=pl.BlockSpec((tr, lanes), lambda i: (i, 0)),
            ),
            compiler_params=pltpu.CompilerParams(
                # Single parallel axis -> shards across the 2 TCs on v7x;
                # harmless no-op on single-TC v5e/v6e.
                dimension_semantics=("parallel",),
            ),
        )(x, inv_col)
        return out.reshape(B, C, H, W)

    return obs_norm, jax.jit(apply)


if __name__ == "__main__":
    # Small deterministic example: batch=2, channels=4, spatial=16x16.
    grid_features = ["agent", "agent:hp", "agent:energy", "agent:inv:ore"]
    key = jax.random.PRNGKey(0)
    kf, ki = jax.random.split(key)

    obs_norm, normalize = make_observation_normalizer(grid_features)

    # Float32 observations (matches the PyTorch module's typical input).
    obs_f = jax.random.uniform(
        kf, (2, len(grid_features), 16, 16), dtype=jnp.float32, maxval=255.0
    )
    out_f = jax.block_until_ready(normalize(obs_f))
    ref_f = obs_f / obs_norm
    assert out_f.shape == ref_f.shape and out_f.dtype == ref_f.dtype
    # multiply-by-reciprocal vs divide: ~1 ulp difference for non-power-of-two norms.
    assert jnp.allclose(out_f, ref_f, rtol=1e-6, atol=1e-5)

    # Integer observations: the int->float cast is fused inside the kernel
    # (same code path also handles uint8 observations).
    obs_i = jax.random.randint(
        ki, (2, len(grid_features), 16, 16), 0, 256, dtype=jnp.int32
    )
    out_i = jax.block_until_ready(normalize(obs_i))
    ref_i = obs_i.astype(jnp.float32) / obs_norm
    assert out_i.shape == ref_i.shape and out_i.dtype == jnp.float32
    assert jnp.allclose(out_i, ref_i, rtol=1e-6, atol=1e-5)

    print("KERNEL_OK")
</pallas_src>

<mosaic_0001>
module attributes {stable_mosaic.version = 11 : i64} {
  func.func @_normalize_kernel(%arg0: i32, %arg1: memref<8x256xf32, #tpu.memory_space<vmem>>, %arg2: memref<8x1xf32, #tpu.memory_space<vmem>>, %arg3: memref<8x256xf32, #tpu.memory_space<vmem>>) attributes {dimension_semantics = [#tpu.dimension_semantics<parallel>], iteration_bounds = array<i64: 1>, scalar_prefetch = 0 : i64, scratch_operands = 0 : i64, tpu.core_type = #tpu.core_type<tc>, window_params = [{transform_indices = @transform_0, window_bounds = array<i64: 8, 256>}, {transform_indices = @transform_1, window_bounds = array<i64: 8, 1>}, {transform_indices = @transform_2, window_bounds = array<i64: 8, 256>}]} {
    %c0 = arith.constant 0 : index
    %c0_0 = arith.constant 0 : index
    %0 = vector.load %arg1[%c0, %c0_0] : memref<8x256xf32, #tpu.memory_space<vmem>>, vector<8x256xf32>
    %c0_1 = arith.constant 0 : index
    %c0_2 = arith.constant 0 : index
    %1 = vector.load %arg2[%c0_1, %c0_2] : memref<8x1xf32, #tpu.memory_space<vmem>>, vector<8x1xf32>
    %2 = vector.broadcast %1 : vector<8x1xf32> to vector<8x256xf32>
    %3 = arith.mulf %0, %2 : vector<8x256xf32>
    %c0_3 = arith.constant 0 : index
    %c0_4 = arith.constant 0 : index
    %4 = vector.load %arg3[%c0_3, %c0_4] : memref<8x256xf32, #tpu.memory_space<vmem>>, vector<8x256xf32>
    tpu.vector_store %arg3[%c0_3, %c0_4], %3 {strides = array<i32>} : memref<8x256xf32, #tpu.memory_space<vmem>>, vector<8x256xf32>,
    return
  }
  func.func @transform_0(%arg0: i32) -> (i32, i32) {
    %c0_i32 = arith.constant 0 : i32
    %c0_i32_0 = arith.constant 0 : i32
    return %arg0, %c0_i32 : i32, i32
  }
  func.func @transform_1(%arg0: i32) -> (i32, i32) {
    %c0_i32 = arith.constant 0 : i32
    %c0_i32_0 = arith.constant 0 : i32
    return %arg0, %c0_i32 : i32, i32
  }
  func.func @transform_2(%arg0: i32) -> (i32, i32) {
    %c0_i32 = arith.constant 0 : i32
    %c0_i32_0 = arith.constant 0 : i32
    return %arg0, %c0_i32 : i32, i32
  }
}

</mosaic_0001>

<llo_original>
// kernel: apply.1
$region0: #{apply.1}
  #allocation0 [shape = 'u32[]', space=smem, size = 0x4, offset = 0x4, fixed_abs, tag = 'smem constant byte address 0x4 - core index']
  #allocation1 [shape = 'u32[144,128]{1,0:T(1,128)}', space=vmem, size = 0x12000, scoped, tag = 'internal scratch']
  %s0 = inlined_call_operand.vmem [shape: f32[8,256], index: 0, kind: input, shape index: {}]
  %s1 = inlined_call_operand.vmem [shape: f32[8,1], index: 1, kind: input, shape index: {}]
  %s2 = inlined_call_operand.vmem [shape: f32[8,256], index: 2, kind: output, shape index: {}]
  %s3 = sld [smem:[#allocation0]]
  $region18: #{apply.1} parent=0
    _
  %s5 = ssub.s32 1, %s3
  %s6 = scalar_select 0, %s5, %s3
  // Predicated region
  $region2: #{apply.1} parent=0 // pred_check
    _
  $region3: #{apply.1} parent=0 // pred_check_branch
    %8 = sbr.rel (0) target = $region5
  $region4: #{apply.1} parent=0 // pred_region
    _
  $region5: #{apply.1} parent=0 // pred_fallthru
    _
  // Predicated region
  $region6: #{apply.1} parent=0 // pred_check
    _
  $region7: #{apply.1} parent=0 // pred_check_branch
    %10 = sbr.rel (0) target = $region9
  $region8: #{apply.1} parent=0 // pred_region
    _
  $region9: #{apply.1} parent=0 // pred_fallthru
    _
  %v11 = vld [vmem:[%s0] sm:$0xff]
  %v12 = vld [vmem:[%s0 + $0x8] sm:$0xff]
  %v13 = vld [vmem:[%s1] sm:$0xff]
  %15 = vset.pattern.permute.xlu0 0
  %16 = vperm.xlu0 %15, %v13
  %v17 = vpop.permute.xlu0 %16
  %v19 = vmul.f32 %v11, %v17
  %v20 = vmul.f32 %v12, %v17
  %21 = vst [vmem:[%s2] sm:$0xff] %v19
  %22 = vst [vmem:[%s2 + $0x8] sm:$0xff] %v20
  // Predicated region
  $region10: #{apply.1} parent=0 // pred_check
    _
  $region11: #{apply.1} parent=0 // pred_check_branch
    %24 = sbr.rel (0) target = $region13
  $region12: #{apply.1} parent=0 // pred_region
    _
  $region13: #{apply.1} parent=0 // pred_fallthru
    _
  // Predicated region
  $region14: #{apply.1} parent=0 // pred_check
    _
  $region15: #{apply.1} parent=0 // pred_check_branch
    %26 = sbr.rel (0) target = $region17
  $region16: #{apply.1} parent=0 // pred_region
    _
  $region17: #{apply.1} parent=0 // pred_fallthru
    _

</llo_original>
